<compile_context>
chip_gen: v7x
topology: tpu7x:2x2x1
jax: 0.10.0
libtpu: 0.0.40
codegen_flags: <defaults>
</compile_context>

<pallas_src>
import jax
import jax.numpy as jnp
from jax import lax
from jax.experimental import pallas as pl
from jax.experimental.pallas import tpu as pltpu


def _round_up(x, m):
    return (x + m - 1) // m * m


def _matmul_bn_kernel(p_ref, w_ref, scale_ref, shift_ref, o_ref):
    # p_ref:     (1, TM, Kp)   im2col patch tile (Kp % 128 == 0, lane-dense)
    # w_ref:     (Kp, TN)      flattened conv weight tile
    # scale_ref: (1, TN)       folded BN scale = gamma / sqrt(var + eps)
    # shift_ref: (1, TN)       folded BN shift = beta - mean * scale
    # o_ref:     (1, TM, TN)   lane-dense output tile
    acc = jnp.dot(p_ref[0], w_ref[...], preferred_element_type=jnp.float32)
    o_ref[0] = (acc * scale_ref[...] + shift_ref[...]).astype(o_ref.dtype)


def basic_conv2d(x_nchw, weight_oihw, gamma, beta, running_mean, running_var,
                 *, stride=1, padding=0, dilation=1, eps=1e-5,
                 tile_m=256, tile_n=128):
    """Conv2d(bias=False) + BatchNorm2d (eval mode). NCHW in / NCHW out."""
    n, c_in, h, w = x_nchw.shape
    c_out, c_in_w, kh, kw = weight_oihw.shape
    assert c_in == c_in_w

    h_out = (h + 2 * padding - dilation * (kh - 1) - 1) // stride + 1
    w_out = (w + 2 * padding - dilation * (kw - 1) - 1) // stride + 1
    m = h_out * w_out
    k = c_in * kh * kw

    # ---- glue (plain JAX): im2col, weight flattening, BN folding, padding ----
    # patches: (N, Cin*KH*KW, Hout, Wout); feature dim ordered (c, kh, kw), c slowest.
    patches = lax.conv_general_dilated_patches(
        x_nchw, (kh, kw), (stride, stride),
        padding=[(padding, padding), (padding, padding)],
        rhs_dilation=(dilation, dilation),
        dimension_numbers=("NCHW", "OIHW", "NCHW"),
    )
    patches = jnp.transpose(patches, (0, 2, 3, 1)).reshape(n, m, k)

    # OIHW -> (K, Cout) with the same (c, kh, kw) ordering as the patches.
    w_flat = weight_oihw.reshape(c_out, k).T

    inv_std = 1.0 / jnp.sqrt(running_var.astype(jnp.float32) + eps)
    scale = gamma.astype(jnp.float32) * inv_std
    shift = beta.astype(jnp.float32) - running_mean.astype(jnp.float32) * scale

    # Lane-dense padding: last dims -> multiple of 128, M -> multiple of tile.
    tm = tile_m if m >= tile_m else _round_up(m, 8)
    tn = tile_n
    m_pad = _round_up(m, tm)
    k_pad = _round_up(k, 128)
    n_pad = _round_up(c_out, tn)

    patches = jnp.pad(patches, ((0, 0), (0, m_pad - m), (0, k_pad - k)))
    w_flat = jnp.pad(w_flat, ((0, k_pad - k), (0, n_pad - c_out)))
    scale = jnp.pad(scale, (0, n_pad - c_out)).reshape(1, n_pad)
    shift = jnp.pad(shift, (0, n_pad - c_out)).reshape(1, n_pad)

    grid = (n, m_pad // tm, n_pad // tn)

    out_flat = pl.pallas_call(
        _matmul_bn_kernel,
        out_shape=jax.ShapeDtypeStruct((n, m_pad, n_pad), x_nchw.dtype),
        grid=grid,
        in_specs=[
            pl.BlockSpec((1, tm, k_pad), lambda b, i, j: (b, i, 0)),
            pl.BlockSpec((k_pad, tn), lambda b, i, j: (0, j)),
            pl.BlockSpec((1, tn), lambda b, i, j: (0, j)),
            pl.BlockSpec((1, tn), lambda b, i, j: (0, j)),
        ],
        out_specs=pl.BlockSpec((1, tm, tn), lambda b, i, j: (b, i, j)),
        compiler_params=pltpu.CompilerParams(
            dimension_semantics=("parallel", "parallel", "parallel"),
            vmem_limit_bytes=48 * 1024 * 1024,
        ),
    )(patches, w_flat, scale, shift)

    out = out_flat[:, :m, :c_out].reshape(n, h_out, w_out, c_out)
    # TODO(synk): keep activations NHWC end-to-end / fuse this transpose into the consumer.
    return jnp.transpose(out, (0, 3, 1, 2))


def _reference(x_nchw, weight_oihw, gamma, beta, mean, var,
               *, stride, padding, dilation, eps=1e-5):
    y = lax.conv_general_dilated(
        x_nchw, weight_oihw,
        window_strides=(stride, stride),
        padding=[(padding, padding), (padding, padding)],
        rhs_dilation=(dilation, dilation),
        dimension_numbers=("NCHW", "OIHW", "NCHW"),
    )
    s = (gamma / jnp.sqrt(var + eps)).reshape(1, -1, 1, 1)
    b = (beta - mean * gamma / jnp.sqrt(var + eps)).reshape(1, -1, 1, 1)
    return y * s + b


if __name__ == "__main__":
    # BasicConv2d(in_planes=4, out_planes=8, kernel_size=3, padding=1)
    N, CIN, H, W = 2, 4, 16, 16
    COUT, K = 8, 3

    key = jax.random.PRNGKey(0)
    kx, kwt, kg, kb, km, kv = jax.random.split(key, 6)

    x = jax.random.normal(kx, (N, CIN, H, W), dtype=jnp.float32)
    weight = jax.random.normal(kwt, (COUT, CIN, K, K), dtype=jnp.float32) * 0.1
    gamma = 1.0 + 0.1 * jax.random.normal(kg, (COUT,), dtype=jnp.float32)
    beta = 0.1 * jax.random.normal(kb, (COUT,), dtype=jnp.float32)
    running_mean = 0.1 * jax.random.normal(km, (COUT,), dtype=jnp.float32)
    running_var = jnp.abs(jax.random.normal(kv, (COUT,), dtype=jnp.float32)) + 0.5

    for stride, pad, dil in [(1, 1, 1), (2, 1, 1)]:
        out = basic_conv2d(x, weight, gamma, beta, running_mean, running_var,
                           stride=stride, padding=pad, dilation=dil)
        out = jax.block_until_ready(out)
        ref = _reference(x, weight, gamma, beta, running_mean, running_var,
                         stride=stride, padding=pad, dilation=dil)
        assert out.shape == ref.shape, (out.shape, ref.shape)
        err = float(jnp.max(jnp.abs(out - ref)))
        assert jnp.allclose(out, ref, atol=1e-4, rtol=1e-4), err

    print("KERNEL_OK")
</pallas_src>

<mosaic_0001>
module attributes {stable_mosaic.version = 11 : i64} {
  func.func @_matmul_bn_kernel(%arg0: i32, %arg1: i32, %arg2: i32, %arg3: memref<1x256x128xf32, #tpu.memory_space<vmem>>, %arg4: memref<128x128xf32, #tpu.memory_space<vmem>>, %arg5: memref<1x128xf32, #tpu.memory_space<vmem>>, %arg6: memref<1x128xf32, #tpu.memory_space<vmem>>, %arg7: memref<1x256x128xf32, #tpu.memory_space<vmem>>) attributes {dimension_semantics = [#tpu.dimension_semantics<parallel>, #tpu.dimension_semantics<parallel>, #tpu.dimension_semantics<parallel>], iteration_bounds = array<i64: 2, 1, 1>, scalar_prefetch = 0 : i64, scratch_operands = 0 : i64, tpu.core_type = #tpu.core_type<tc>, window_params = [{transform_indices = @transform_0, window_bounds = array<i64: 1, 256, 128>}, {transform_indices = @transform_1, window_bounds = array<i64: 128, 128>}, {transform_indices = @transform_2, window_bounds = array<i64: 1, 128>}, {transform_indices = @transform_3, window_bounds = array<i64: 1, 128>}, {transform_indices = @transform_4, window_bounds = array<i64: 1, 256, 128>}]} {
    %c0 = arith.constant 0 : index
    %c0_0 = arith.constant 0 : index
    %c0_1 = arith.constant 0 : index
    %0 = vector.load %arg3[%c0, %c0_0, %c0_1] : memref<1x256x128xf32, #tpu.memory_space<vmem>>, vector<1x256x128xf32>
    %1 = vector.shape_cast %0 : vector<1x256x128xf32> to vector<256x128xf32>
    %c0_2 = arith.constant 0 : index
    %c0_3 = arith.constant 0 : index
    %2 = vector.load %arg4[%c0_2, %c0_3] : memref<128x128xf32, #tpu.memory_space<vmem>>, vector<128x128xf32>
    %cst = arith.constant dense<0.000000e+00> : vector<256x128xf32>
    %3 = tpu.matmul %1, %2, %cst {dimension_numbers = #tpu.dot_dimension_numbers<[1], [0], [0], [1], [0, 0, 1, 1], [], []>} : vector<256x128xf32>, vector<128x128xf32>, vector<256x128xf32> -> vector<256x128xf32>
    %c0_4 = arith.constant 0 : index
    %c0_5 = arith.constant 0 : index
    %4 = vector.load %arg5[%c0_4, %c0_5] : memref<1x128xf32, #tpu.memory_space<vmem>>, vector<1x128xf32>
    %5 = vector.broadcast %4 : vector<1x128xf32> to vector<256x128xf32>
    %6 = arith.mulf %3, %5 : vector<256x128xf32>
    %c0_6 = arith.constant 0 : index
    %c0_7 = arith.constant 0 : index
    %7 = vector.load %arg6[%c0_6, %c0_7] : memref<1x128xf32, #tpu.memory_space<vmem>>, vector<1x128xf32>
    %8 = vector.broadcast %7 : vector<1x128xf32> to vector<256x128xf32>
    %9 = arith.addf %6, %8 : vector<256x128xf32>
    %c0_8 = arith.constant 0 : index
    %c0_9 = arith.constant 0 : index
    %c0_10 = arith.constant 0 : index
    %10 = vector.load %arg7[%c0_8, %c0_9, %c0_10] : memref<1x256x128xf32, #tpu.memory_space<vmem>>, vector<1x256x128xf32>
    %11 = vector.shape_cast %10 : vector<1x256x128xf32> to vector<256x128xf32>
    %12 = vector.shape_cast %9 : vector<256x128xf32> to vector<1x256x128xf32>
    tpu.vector_store %arg7[%c0_8, %c0_9, %c0_10], %12 {strides = array<i32>} : memref<1x256x128xf32, #tpu.memory_space<vmem>>, vector<1x256x128xf32>,
    return
  }
  func.func @transform_0(%arg0: i32, %arg1: i32, %arg2: i32) -> (i32, i32, i32) {
    %c0_i32 = arith.constant 0 : i32
    %c0_i32_0 = arith.constant 0 : i32
    return %arg0, %arg1, %c0_i32 : i32, i32, i32
  }
  func.func @transform_1(%arg0: i32, %arg1: i32, %arg2: i32) -> (i32, i32) {
    %c0_i32 = arith.constant 0 : i32
    %c0_i32_0 = arith.constant 0 : i32
    return %c0_i32, %arg2 : i32, i32
  }
  func.func @transform_2(%arg0: i32, %arg1: i32, %arg2: i32) -> (i32, i32) {
    %c0_i32 = arith.constant 0 : i32
    %c0_i32_0 = arith.constant 0 : i32
    return %c0_i32, %arg2 : i32, i32
  }
  func.func @transform_3(%arg0: i32, %arg1: i32, %arg2: i32) -> (i32, i32) {
    %c0_i32 = arith.constant 0 : i32
    %c0_i32_0 = arith.constant 0 : i32
    return %c0_i32, %arg2 : i32, i32
  }
  func.func @transform_4(%arg0: i32, %arg1: i32, %arg2: i32) -> (i32, i32, i32) {
    %c0_i32 = arith.constant 0 : i32
    return %arg0, %arg1, %arg2 : i32, i32, i32
  }
}

</mosaic_0001>

<llo_original>
// kernel: tpu_custom_call.1
$region0: #{tpu_custom_call.1}
  #allocation0 [shape = 'u32[]', space=smem, size = 0x4, offset = 0x4, fixed_abs, tag = 'smem constant byte address 0x4 - core index']
  #allocation1 [shape = 'u32[144,128]{1,0:T(1,128)}', space=vmem, size = 0x12000, scoped, tag = 'internal scratch']
  %s0 = inlined_call_operand.hbm [shape: f32[2,256,128], index: 0, kind: input, shape index: {}]
  %s1 = inlined_call_operand.hbm [shape: f32[128,128], index: 1, kind: input, shape index: {}]
  %s2 = inlined_call_operand.vmem [shape: f32[1,128], index: 2, kind: input, shape index: {}]
  %s3 = inlined_call_operand.vmem [shape: f32[1,128], index: 3, kind: input, shape index: {}]
  %s4 = inlined_call_operand.hbm [shape: f32[2,256,128], index: 4, kind: output, shape index: {}]
  %s5 = sld [smem:[#allocation0]]
  $region57: #{tpu_custom_call.1} parent=0
    _
  %s7 = ssub.s32 1, %s5
  %s8 = scalar_select 0, %s7, %s5
  $region1: #{tpu_custom_call.1} parent=0
    #allocation2 [shape = 'u8[262144]{0}', space=vmem, size = 0x40000, scoped, tag = 'input window, operand 0']
    #allocation3 [shape = 's32[2]{0}', space=sflag, size = 0x8, scoped, tag = 'scoped memory for tpu_custom_call.1']
    #allocation4 [shape = 's32[2]{0}', space=sflag, size = 0x8, scoped, tag = 'scoped memory for tpu_custom_call.1']
    #allocation5 [shape = 'u8[65536]{0}', space=vmem, size = 0x10000, scoped, tag = 'input window, operand 1, single buffered']
    #allocation6 [shape = 's32[1]{0}', space=sflag, size = 0x4, scoped, tag = 'scoped memory for tpu_custom_call.1']
    #allocation7 [shape = 'u8[262144]{0}', space=vmem, size = 0x40000, scoped, tag = 'output window, operand 0']
    %9 = vsyncpa [#allocation3], 0
    %s10 = scalar_lea.sflag [#allocation3], 1
    %11 = vsyncpa %s10, 0
    %12 = vsyncpa [#allocation6], 0
    %13 = vsyncpa [#allocation4], 0
    %s14 = scalar_lea.sflag [#allocation4], 1
    %15 = vsyncpa %s14, 0
    loop: start=0, step=1, limit=4
    $region2: #{tpu_custom_call.1} parent=1 // loop_pre_header
      _
    $region3: #{tpu_custom_call.1} parent=1 // loop_header
      %s17 = sphi 0, %s21
      %p18 = scmp.ge.s32.totalorder %s17, 4
      %s24 = sphi 0, %s43
      %s25 = sphi 0, %s39
      %s26 = sphi 0, %s35
      %s27 = sphi 0, %s24
      %s28 = sphi 0, %s25
      %s29 = sphi 0, %s26
      %s30 = sphi 0, %s27
      %s31 = sphi 0, %s28
      %s32 = sphi 0, %s29
      %s48 = sphi 0, %s50
      %s51 = sphi 0, %s48
      %s52 = sphi 0, %s51
      %s68 = sphi 0, %s52
      %s74 = sphi 0, %s76
      %s77 = sphi 0, %s74
      %s78 = sphi 0, %s77
      %s94 = sphi 0, %s78
      %s100 = sphi 0, %s102
      %s103 = sphi 0, %s100
      %s104 = sphi 0, %s103
      %s120 = sphi 0, %s104
      %s126 = sphi 0, %s128
      %s129 = sphi 0, %s126
      %s130 = sphi 0, %s129
      %s146 = sphi 0, %s130
      %s156 = sphi 0, %s158
      %s159 = sphi 0, %s156
      %s160 = sphi 0, %s159
      %s176 = sphi 0, %s160
    $region4: #{tpu_custom_call.1} parent=1 // loop_header_branch
      %20 = sbr.rel (%p18) target = $region8
    $region5: #{tpu_custom_call.1} parent=1 // loop_body
      %s22 = ssub.s32 %s17, 1
      %s23 = ssub.s32 %s17, 2
      %s33 = sadd.s32 1, %s26
      %p34 = scmp.ge.s32.totalorder %s33, 1
      %s35 = scalar_select %p34, 0, %s33
      %s36 = sadd.s32 1, %s25
      %s37 = scalar_select %p34, %s36, %s25
      %p38 = scmp.ge.s32.totalorder %s37, 1
      %s39 = scalar_select %p38, 0, %s37
      %s40 = sadd.s32 1, %s24
      %s41 = scalar_select %p38, %s40, %s24
      %p42 = scmp.ge.s32.totalorder %s41, 2
      %s43 = scalar_select %p42, 0, %s41
      %s44 = ssub.s32 %s24, %s43
      %s45 = ssub.s32 %s25, %s39
      %s46 = sor.u32 %s44, %s45
      %p47 = scmp.eq.s32.totalorder %s46, 0
      %s49 = sadd.s32 %s48, 1
      %s50 = scalar_select %p47, %s48, %s49
      %p53 = pneg %p47
      %p54 = scmp.eq.s32.totalorder %s17, 1
      %p55 = por %p53, %p54
      %p56 = scmp.ne.s32.totalorder %s48, %s51
      %p57 = scmp.eq.s32.totalorder %s17, 0
      %p58 = por %p56, %p57
      %p59 = scmp.ne.s32.totalorder %s48, %s51
      %p60 = scmp.eq.s32.totalorder %s22, 1
      %p61 = por %p59, %p60
      %p62 = scmp.ne.s32.totalorder %s51, %s52
      %p63 = scmp.eq.s32.totalorder %s22, 0
      %p64 = por %p62, %p63
      %p65 = scmp.ne.s32.totalorder %s51, %s52
      %p66 = scmp.eq.s32.totalorder %s23, 1
      %p67 = por %p65, %p66
      %p69 = scmp.ne.s32.totalorder %s52, %s68
      %p70 = scmp.eq.s32.totalorder %s23, 0
      %p71 = por %p69, %p70
      %s72 = ssub.s32 %s26, %s35
      %p73 = scmp.eq.s32.totalorder %s72, 0
      %s75 = sadd.s32 %s74, 1
      %s76 = scalar_select %p73, %s74, %s75
      %p79 = pneg %p73
      %p80 = scmp.eq.s32.totalorder %s17, 1
      %p81 = por %p79, %p80
      %p82 = scmp.ne.s32.totalorder %s74, %s77
      %p83 = scmp.eq.s32.totalorder %s17, 0
      %p84 = por %p82, %p83
      %p85 = scmp.ne.s32.totalorder %s74, %s77
      %p86 = scmp.eq.s32.totalorder %s22, 1
      %p87 = por %p85, %p86
      %p88 = scmp.ne.s32.totalorder %s77, %s78
      %p89 = scmp.eq.s32.totalorder %s22, 0
      %p90 = por %p88, %p89
      %p91 = scmp.ne.s32.totalorder %s77, %s78
      %p92 = scmp.eq.s32.totalorder %s23, 1
      %p93 = por %p91, %p92
      %p95 = scmp.ne.s32.totalorder %s78, %s94
      %p96 = scmp.eq.s32.totalorder %s23, 0
      %p97 = por %p95, %p96
      %s98 = ssub.s32 %s26, %s35
      %p99 = scmp.eq.s32.totalorder %s98, 0
      %s101 = sadd.s32 %s100, 1
      %s102 = scalar_select %p99, %s100, %s101
      %p105 = pneg %p99
      %p106 = scmp.eq.s32.totalorder %s17, 1
      %p107 = por %p105, %p106
      %p108 = scmp.ne.s32.totalorder %s100, %s103
      %p109 = scmp.eq.s32.totalorder %s17, 0
      %p110 = por %p108, %p109
      %p111 = scmp.ne.s32.totalorder %s100, %s103
      %p112 = scmp.eq.s32.totalorder %s22, 1
      %p113 = por %p111, %p112
      %p114 = scmp.ne.s32.totalorder %s103, %s104
      %p115 = scmp.eq.s32.totalorder %s22, 0
      %p116 = por %p114, %p115
      %p117 = scmp.ne.s32.totalorder %s103, %s104
      %p118 = scmp.eq.s32.totalorder %s23, 1
      %p119 = por %p117, %p118
      %p121 = scmp.ne.s32.totalorder %s104, %s120
      %p122 = scmp.eq.s32.totalorder %s23, 0
      %p123 = por %p121, %p122
      %s124 = ssub.s32 %s26, %s35
      %p125 = scmp.eq.s32.totalorder %s124, 0
      %s127 = sadd.s32 %s126, 1
      %s128 = scalar_select %p125, %s126, %s127
      %p131 = pneg %p125
      %p132 = scmp.eq.s32.totalorder %s17, 1
      %p133 = por %p131, %p132
      %p134 = scmp.ne.s32.totalorder %s126, %s129
      %p135 = scmp.eq.s32.totalorder %s17, 0
      %p136 = por %p134, %p135
      %p137 = scmp.ne.s32.totalorder %s126, %s129
      %p138 = scmp.eq.s32.totalorder %s22, 1
      %p139 = por %p137, %p138
      %p140 = scmp.ne.s32.totalorder %s129, %s130
      %p141 = scmp.eq.s32.totalorder %s22, 0
      %p142 = por %p140, %p141
      %p143 = scmp.ne.s32.totalorder %s129, %s130
      %p144 = scmp.eq.s32.totalorder %s23, 1
      %p145 = por %p143, %p144
      %p147 = scmp.ne.s32.totalorder %s130, %s146
      %p148 = scmp.eq.s32.totalorder %s23, 0
      %p149 = por %p147, %p148
      %s150 = ssub.s32 %s24, %s43
      %s151 = ssub.s32 %s25, %s39
      %s152 = sor.u32 %s150, %s151
      %s153 = ssub.s32 %s26, %s35
      %s154 = sor.u32 %s152, %s153
      %p155 = scmp.eq.s32.totalorder %s154, 0
      %s157 = sadd.s32 %s156, 1
      %s158 = scalar_select %p155, %s156, %s157
      %p161 = pneg %p155
      %p162 = scmp.eq.s32.totalorder %s17, 1
      %p163 = por %p161, %p162
      %p164 = scmp.ne.s32.totalorder %s156, %s159
      %p165 = scmp.eq.s32.totalorder %s17, 0
      %p166 = por %p164, %p165
      %p167 = scmp.ne.s32.totalorder %s156, %s159
      %p168 = scmp.eq.s32.totalorder %s22, 1
      %p169 = por %p167, %p168
      %p170 = scmp.ne.s32.totalorder %s159, %s160
      %p171 = scmp.eq.s32.totalorder %s22, 0
      %p172 = por %p170, %p171
      %p173 = scmp.ne.s32.totalorder %s159, %s160
      %p174 = scmp.eq.s32.totalorder %s23, 1
      %p175 = por %p173, %p174
      %p177 = scmp.ne.s32.totalorder %s160, %s176
      %p178 = scmp.eq.s32.totalorder %s23, 0
      %p179 = por %p177, %p178
      %p180 = scmp.le.s32.totalorder 1, %s17
      %p181 = scmp.lt.s32.totalorder %s17, 3
      %p182 = pnand %p180, %p181
      %p183 = pneg %p182
      // Predicated region
      $region9: #{tpu_custom_call.1} parent=5 // pred_check
        _
      $region10: #{tpu_custom_call.1} parent=5 // pred_check_branch
        %185 = sbr.rel (%p182) target = $region12
      $region11: #{tpu_custom_call.1} parent=5 // pred_region
        %s186 = ssub.s32 %s17, 1
        // Predicated region
        $region13: #{tpu_custom_call.1} parent=11 // pred_check
          %p187 = pneg %p90
        $region14: #{tpu_custom_call.1} parent=11 // pred_check_branch
          %189 = sbr.rel (%p187) target = $region16
        $region15: #{tpu_custom_call.1} parent=11 // pred_region
          %s191 = ssub.s32 2048, 2048
          %192 = vsyncadd [#allocation6], %s191
          %s193 = smul.addr %s29, 128
          %s194 = scalar_lea.hbm %s1, %s193
          %s195 = sshll.u32 [#allocation5], 4
          %s196 = int_to_ptr.vmem [resolvable:$true] %s195
          %201 = dma.hbm_to_vmem [thread:$0]  %s194, 2048, %s196, [#allocation6], 128, 128, 8
        $region16: #{tpu_custom_call.1} parent=11 // pred_fallthru
          _
        // Predicated region
        $region17: #{tpu_custom_call.1} parent=11 // pred_check
          %p202 = pneg %p116
        $region18: #{tpu_custom_call.1} parent=11 // pred_check_branch
          %204 = sbr.rel (%p202) target = $region20
        $region19: #{tpu_custom_call.1} parent=11 // pred_region
          %p205 = scmp.lt.s32.totalorder %s29, 0
          %s206 = scalar_select %p205, %s29, 0
          %s207 = scalar_lea.vmem %s2, %s206
        $region20: #{tpu_custom_call.1} parent=11 // pred_fallthru
          _
        // Predicated region
        $region21: #{tpu_custom_call.1} parent=11 // pred_check
          %p208 = pneg %p142
        $region22: #{tpu_custom_call.1} parent=11 // pred_check_branch
          %210 = sbr.rel (%p208) target = $region24
        $region23: #{tpu_custom_call.1} parent=11 // pred_region
          %p211 = scmp.lt.s32.totalorder %s29, 0
          %s212 = scalar_select %p211, %s29, 0
          %s213 = scalar_lea.vmem %s3, %s212
        $region24: #{tpu_custom_call.1} parent=11 // pred_fallthru
          _
      $region12: #{tpu_custom_call.1} parent=5 // pred_fallthru
        _
      %p214 = scmp.lt.s32.totalorder %s17, 2
      // Predicated region
      $region25: #{tpu_custom_call.1} parent=5 // pred_check
        %p215 = pneg %p214
      $region26: #{tpu_custom_call.1} parent=5 // pred_check_branch
        %217 = sbr.rel (%p215) target = $region28
      $region27: #{tpu_custom_call.1} parent=5 // pred_region
        // Predicated region
        $region29: #{tpu_custom_call.1} parent=27 // pred_check
          %p218 = pneg %p58
        $region30: #{tpu_custom_call.1} parent=27 // pred_check_branch
          %220 = sbr.rel (%p218) target = $region32
        $region31: #{tpu_custom_call.1} parent=27 // pred_region
          %s221 = sand.u32 %s48, 1
          %s222 = scalar_lea.sflag [#allocation3], %s221
          %s223 = sand.u32 %s48, 1
          %s224 = smul.addr %s223, 256
          %s225 = scalar_lea.vmem [#allocation2], %s224
          %s226 = smul.u32 32, %s25
          %s228 = ssub.s32 4096, 4096
          %229 = vsyncadd %s222, %s228
          %s230 = smul.addr %s24, 32
          %s231 = sadd.s32 %s226, %s230
          %s232 = smul.addr %s231, 128
          %s233 = scalar_lea.hbm %s0, %s232
          %s234 = sshll.u32 %s225, 4
          %s235 = int_to_ptr.vmem [resolvable:$true] %s234
          %240 = dma.hbm_to_vmem [thread:$0]  %s233, 4096, %s235, %s222, 128, 128, 8
        $region32: #{tpu_custom_call.1} parent=27 // pred_fallthru
          _
      $region28: #{tpu_custom_call.1} parent=5 // pred_fallthru
        _
      %p241 = scmp.le.s32.totalorder 1, %s17
      %p242 = scmp.lt.s32.totalorder %s17, 3
      %p243 = pnand %p241, %p242
      %p244 = pneg %p243
      // Predicated region
      $region33: #{tpu_custom_call.1} parent=5 // pred_check
        _
      $region34: #{tpu_custom_call.1} parent=5 // pred_check_branch
        %246 = sbr.rel (%p243) target = $region36
      $region35: #{tpu_custom_call.1} parent=5 // pred_region
        %s247 = ssub.s32 %s17, 1
        %s248 = sand.u32 %s51, 1
        %s249 = scalar_lea.sflag [#allocation3], %s248
        %s250 = sand.u32 %s51, 1
        %s251 = smul.addr %s250, 256
        %s252 = scalar_lea.vmem [#allocation2], %s251
        // Predicated region
        $region37: #{tpu_custom_call.1} parent=35 // pred_check
          %p253 = pneg %p64
        $region38: #{tpu_custom_call.1} parent=35 // pred_check_branch
          %255 = sbr.rel (%p253) target = $region40
        $region39: #{tpu_custom_call.1} parent=35 // pred_region
          %256 = dma.done %s249, 4096
        $region40: #{tpu_custom_call.1} parent=35 // pred_fallthru
          _
        // Predicated region
        $region41: #{tpu_custom_call.1} parent=35 // pred_check
          %p257 = pneg %p90
        $region42: #{tpu_custom_call.1} parent=35 // pred_check_branch
          %259 = sbr.rel (%p257) target = $region44
        $region43: #{tpu_custom_call.1} parent=35 // pred_region
          %260 = dma.done [#allocation6], 2048
        $region44: #{tpu_custom_call.1} parent=35 // pred_fallthru
          _
        %s261 = sand.u32 %s51, 1
        %s262 = scalar_lea.sflag [#allocation3], %s261
        %s263 = sand.u32 %s51, 1
        %s264 = smul.addr %s263, 256
        %s265 = scalar_lea.vmem [#allocation2], %s264
        %p266 = pneg %p64
        %p267 = pneg %p61
        %p268 = pneg %p90
        %p269 = pneg %p87
        %p270 = scmp.lt.s32.totalorder %s29, 0
        %s271 = scalar_select %p270, %s29, 0
        %s272 = scalar_lea.vmem %s2, %s271
        %p273 = pneg %p116
        %p274 = pneg %p113
        %p275 = scmp.lt.s32.totalorder %s29, 0
        %s276 = scalar_select %p275, %s29, 0
        %s277 = scalar_lea.vmem %s3, %s276
        %p278 = pneg %p142
        %p279 = pneg %p139
        %p280 = pneg %p172
        %p281 = pneg %p169
        %s282 = sand.u32 %s159, 1
        %s283 = scalar_lea.sflag [#allocation4], %s282
        %s284 = sand.u32 %s159, 1
        %s285 = smul.addr %s284, 256
        %s286 = scalar_lea.vmem [#allocation7], %s285
        %s287 = smul.u32 32, %s28
        %p288 = scmp.lt.s32.totalorder %s29, 0
        %s289 = scalar_select %p288, %s29, 0
        %s290 = scalar_lea.vmem %s2, %s289
        %p291 = scmp.lt.s32.totalorder %s29, 0
        %s292 = scalar_select %p291, %s29, 0
        %s293 = scalar_lea.vmem %s3, %s292
        %s294 = smul.u32 32, %s28
        %v295 = vld [vmem:[%s252] sm:$0xff]
        %v296 = vld [vmem:[%s252 + $0x8] sm:$0xff]
        %v297 = vld [vmem:[%s252 + $0x10] sm:$0xff]
        %v298 = vld [vmem:[%s252 + $0x18] sm:$0xff]
        %v299 = vld [vmem:[%s252 + $0x20] sm:$0xff]
        %v300 = vld [vmem:[%s252 + $0x28] sm:$0xff]
        %v301 = vld [vmem:[%s252 + $0x30] sm:$0xff]
        %v302 = vld [vmem:[%s252 + $0x38] sm:$0xff]
        %v303 = vld [vmem:[%s252 + $0x40] sm:$0xff]
        %v304 = vld [vmem:[%s252 + $0x48] sm:$0xff]
        %v305 = vld [vmem:[%s252 + $0x50] sm:$0xff]
        %v306 = vld [vmem:[%s252 + $0x58] sm:$0xff]
        %v307 = vld [vmem:[%s252 + $0x60] sm:$0xff]
        %v308 = vld [vmem:[%s252 + $0x68] sm:$0xff]
        %v309 = vld [vmem:[%s252 + $0x70] sm:$0xff]
        %v310 = vld [vmem:[%s252 + $0x78] sm:$0xff]
        %v311 = vld [vmem:[%s252 + $0x80] sm:$0xff]
        %v312 = vld [vmem:[%s252 + $0x88] sm:$0xff]
        %v313 = vld [vmem:[%s252 + $0x90] sm:$0xff]
        %v314 = vld [vmem:[%s252 + $0x98] sm:$0xff]
        %v315 = vld [vmem:[%s252 + $0xa0] sm:$0xff]
        %v316 = vld [vmem:[%s252 + $0xa8] sm:$0xff]
        %v317 = vld [vmem:[%s252 + $0xb0] sm:$0xff]
        %v318 = vld [vmem:[%s252 + $0xb8] sm:$0xff]
        %v319 = vld [vmem:[%s252 + $0xc0] sm:$0xff]
        %v320 = vld [vmem:[%s252 + $0xc8] sm:$0xff]
        %v321 = vld [vmem:[%s252 + $0xd0] sm:$0xff]
        %v322 = vld [vmem:[%s252 + $0xd8] sm:$0xff]
        %v323 = vld [vmem:[%s252 + $0xe0] sm:$0xff]
        %v324 = vld [vmem:[%s252 + $0xe8] sm:$0xff]
        %v325 = vld [vmem:[%s252 + $0xf0] sm:$0xff]
        %v326 = vld [vmem:[%s252 + $0xf8] sm:$0xff]
        %v327 = vld [vmem:[#allocation5] sm:$0xff]
        %v328 = vld [vmem:[#allocation5 + $0x8] sm:$0xff]
        %v329 = vld [vmem:[#allocation5 + $0x10] sm:$0xff]
        %v330 = vld [vmem:[#allocation5 + $0x18] sm:$0xff]
        %v331 = vld [vmem:[#allocation5 + $0x20] sm:$0xff]
        %v332 = vld [vmem:[#allocation5 + $0x28] sm:$0xff]
        %v333 = vld [vmem:[#allocation5 + $0x30] sm:$0xff]
        %v334 = vld [vmem:[#allocation5 + $0x38] sm:$0xff]
        %v335 = vld [vmem:[#allocation5 + $0x40] sm:$0xff]
        %v336 = vld [vmem:[#allocation5 + $0x48] sm:$0xff]
        %v337 = vld [vmem:[#allocation5 + $0x50] sm:$0xff]
        %v338 = vld [vmem:[#allocation5 + $0x58] sm:$0xff]
        %v339 = vld [vmem:[#allocation5 + $0x60] sm:$0xff]
        %v340 = vld [vmem:[#allocation5 + $0x68] sm:$0xff]
        %v341 = vld [vmem:[#allocation5 + $0x70] sm:$0xff]
        %v342 = vld [vmem:[#allocation5 + $0x78] sm:$0xff]
        %343 = vmatprep.subr.mxu0 0.0
        %344 = vmatpush1.msra.mxu0 %v327
        %345 = vmatprep.subr.mxu0 0.0
        %346 = vmatpush1.msra.mxu0 %v328
        %347 = vmatprep.subr.mxu0 0.0
        %348 = vmatpush1.msra.mxu0 %v329
        %349 = vmatprep.subr.mxu0 0.0
        %350 = vmatpush1.msra.mxu0 %v330
        %351 = vmatprep.subr.mxu0 0.0
        %352 = vmatpush1.msra.mxu0 %v331
        %353 = vmatprep.subr.mxu0 0.0
        %354 = vmatpush1.msra.mxu0 %v332
        %355 = vmatprep.subr.mxu0 0.0
        %356 = vmatpush1.msra.mxu0 %v333
        %357 = vmatprep.subr.mxu0 0.0
        %358 = vmatpush1.msra.mxu0 %v334
        %359 = vmatprep.subr.mxu0 0.0
        %360 = vmatpush1.msra.mxu0 %v335
        %361 = vmatprep.subr.mxu0 0.0
        %362 = vmatpush1.msra.mxu0 %v336
        %363 = vmatprep.subr.mxu0 0.0
        %364 = vmatpush1.msra.mxu0 %v337
        %365 = vmatprep.subr.mxu0 0.0
        %366 = vmatpush1.msra.mxu0 %v338
        %367 = vmatprep.subr.mxu0 0.0
        %368 = vmatpush1.msra.mxu0 %v339
        %369 = vmatprep.subr.mxu0 0.0
        %370 = vmatpush1.msra.mxu0 %v340
        %371 = vmatprep.subr.mxu0 0.0
        %372 = vmatpush1.msra.mxu0 %v341
        %373 = vmatprep.subr.mxu0 0.0
        %374 = vmatpush1.msra.mxu0 %v342
        %375 = vmatprep.subr.mxu0 0.0
        %376 = vmatpush1.msra.mxu0 0.0
        %377 = vmatprep.subr.mxu0 0.0
        %378 = vmatpush1.msra.mxu0 0.0
        %379 = vmatprep.subr.mxu0 0.0
        %380 = vmatpush1.msra.mxu0 0.0
        %381 = vmatprep.subr.mxu0 0.0
        %382 = vmatpush1.msra.mxu0 0.0
        %383 = vmatprep.subr.mxu0 0.0
        %384 = vmatpush1.msra.mxu0 0.0
        %385 = vmatprep.subr.mxu0 0.0
        %386 = vmatpush1.msra.mxu0 0.0
        %387 = vmatprep.subr.mxu0 0.0
        %388 = vmatpush1.msra.mxu0 0.0
        %389 = vmatprep.subr.mxu0 0.0
        %390 = vmatpush1.msra.mxu0 0.0
        %391 = vmatprep.subr.mxu0 0.0
        %392 = vmatpush1.msra.mxu0 0.0
        %393 = vmatprep.subr.mxu0 0.0
        %394 = vmatpush1.msra.mxu0 0.0
        %395 = vmatprep.subr.mxu0 0.0
        %396 = vmatpush1.msra.mxu0 0.0
        %397 = vmatprep.subr.mxu0 0.0
        %398 = vmatpush1.msra.mxu0 0.0
        %399 = vmatprep.subr.mxu0 0.0
        %400 = vmatpush1.msra.mxu0 0.0
        %401 = vmatprep.subr.mxu0 0.0
        %402 = vmatpush1.msra.mxu0 0.0
        %403 = vmatprep.subr.mxu0 0.0
        %404 = vmatpush1.msra.mxu0 0.0
        %405 = vmatprep.subr.mxu0 0.0
        %406 = vmatpush1.msra.mxu0 0.0
        %407 = vmatprep.mubr.f32.mxu0 0.0
        %408 = vmatmul.mubr.f32.gmra.mrb[0].mxu0 %v295
        %v409 = vpop.f32.mrb[0].mxu0
        %v410 = vadd.f32 0.0, %v409
        %v411 = vpop.f32.mrb[0].mxu0
        %412 = vmatprep.mubr.f32.mxu0 0.0
        %413 = vmatmul.mubr.f32.gmra.mrb[0].mxu0 %v296
        %v414 = vpop.f32.mrb[0].mxu0
        %v415 = vadd.f32 0.0, %v414
        %v416 = vpop.f32.mrb[0].mxu0
        %417 = vmatprep.mubr.f32.mxu0 0.0
        %418 = vmatmul.mubr.f32.gmra.mrb[0].mxu0 %v297
        %v419 = vpop.f32.mrb[0].mxu0
        %v420 = vadd.f32 0.0, %v419
        %v421 = vpop.f32.mrb[0].mxu0
        %422 = vmatprep.mubr.f32.mxu0 0.0
        %423 = vmatmul.mubr.f32.gmra.mrb[0].mxu0 %v298
        %v424 = vpop.f32.mrb[0].mxu0
        %v425 = vadd.f32 0.0, %v424
        %v426 = vpop.f32.mrb[0].mxu0
        %427 = vmatprep.mubr.f32.mxu0 0.0
        %428 = vmatmul.mubr.f32.gmra.mrb[0].mxu0 %v299
        %v429 = vpop.f32.mrb[0].mxu0
        %v430 = vadd.f32 0.0, %v429
        %v431 = vpop.f32.mrb[0].mxu0
        %432 = vmatprep.mubr.f32.mxu0 0.0
        %433 = vmatmul.mubr.f32.gmra.mrb[0].mxu0 %v300
        %v434 = vpop.f32.mrb[0].mxu0
        %v435 = vadd.f32 0.0, %v434
        %v436 = vpop.f32.mrb[0].mxu0
        %437 = vmatprep.mubr.f32.mxu0 0.0
        %438 = vmatmul.mubr.f32.gmra.mrb[0].mxu0 %v301
        %v439 = vpop.f32.mrb[0].mxu0
        %v440 = vadd.f32 0.0, %v439
        %v441 = vpop.f32.mrb[0].mxu0
        %442 = vmatprep.mubr.f32.mxu0 0.0
        %443 = vmatmul.mubr.f32.gmra.mrb[0].mxu0 %v302
        %v444 = vpop.f32.mrb[0].mxu0
        %v445 = vadd.f32 0.0, %v444
        %v446 = vpop.f32.mrb[0].mxu0
        %447 = vmatprep.mubr.f32.mxu0 0.0
        %448 = vmatmul.mubr.f32.gmra.mrb[0].mxu0 %v303
        %v449 = vpop.f32.mrb[0].mxu0
        %v450 = vadd.f32 0.0, %v449
        %v451 = vpop.f32.mrb[0].mxu0
        %452 = vmatprep.mubr.f32.mxu0 0.0
        %453 = vmatmul.mubr.f32.gmra.mrb[0].mxu0 %v304
        %v454 = vpop.f32.mrb[0].mxu0
        %v455 = vadd.f32 0.0, %v454
        %v456 = vpop.f32.mrb[0].mxu0
        %457 = vmatprep.mubr.f32.mxu0 0.0
        %458 = vmatmul.mubr.f32.gmra.mrb[0].mxu0 %v305
        %v459 = vpop.f32.mrb[0].mxu0
        %v460 = vadd.f32 0.0, %v459
        %v461 = vpop.f32.mrb[0].mxu0
        %462 = vmatprep.mubr.f32.mxu0 0.0
        %463 = vmatmul.mubr.f32.gmra.mrb[0].mxu0 %v306
        %v464 = vpop.f32.mrb[0].mxu0
        %v465 = vadd.f32 0.0, %v464
        %v466 = vpop.f32.mrb[0].mxu0
        %467 = vmatprep.mubr.f32.mxu0 0.0
        %468 = vmatmul.mubr.f32.gmra.mrb[0].mxu0 %v307
        %v469 = vpop.f32.mrb[0].mxu0
        %v470 = vadd.f32 0.0, %v469
        %v471 = vpop.f32.mrb[0].mxu0
        %472 = vmatprep.mubr.f32.mxu0 0.0
        %473 = vmatmul.mubr.f32.gmra.mrb[0].mxu0 %v308
        %v474 = vpop.f32.mrb[0].mxu0
        %v475 = vadd.f32 0.0, %v474
        %v476 = vpop.f32.mrb[0].mxu0
        %477 = vmatprep.mubr.f32.mxu0 0.0
        %478 = vmatmul.mubr.f32.gmra.mrb[0].mxu0 %v309
        %v479 = vpop.f32.mrb[0].mxu0
        %v480 = vadd.f32 0.0, %v479
        %v481 = vpop.f32.mrb[0].mxu0
        %482 = vmatprep.mubr.f32.mxu0 0.0
        %483 = vmatmul.mubr.f32.gmra.mrb[0].mxu0 %v310
        %v484 = vpop.f32.mrb[0].mxu0
        %v485 = vadd.f32 0.0, %v484
        %v486 = vpop.f32.mrb[0].mxu0
        %487 = vmatprep.mubr.f32.mxu0 0.0
        %488 = vmatmul.mubr.f32.gmra.mrb[0].mxu0 %v311
        %v489 = vpop.f32.mrb[0].mxu0
        %v490 = vadd.f32 0.0, %v489
        %v491 = vpop.f32.mrb[0].mxu0
        %492 = vmatprep.mubr.f32.mxu0 0.0
        %493 = vmatmul.mubr.f32.gmra.mrb[0].mxu0 %v312
        %v494 = vpop.f32.mrb[0].mxu0
        %v495 = vadd.f32 0.0, %v494
        %v496 = vpop.f32.mrb[0].mxu0
        %497 = vmatprep.mubr.f32.mxu0 0.0
        %498 = vmatmul.mubr.f32.gmra.mrb[0].mxu0 %v313
        %v499 = vpop.f32.mrb[0].mxu0
        %v500 = vadd.f32 0.0, %v499
        %v501 = vpop.f32.mrb[0].mxu0
        %502 = vmatprep.mubr.f32.mxu0 0.0
        %503 = vmatmul.mubr.f32.gmra.mrb[0].mxu0 %v314
        %v504 = vpop.f32.mrb[0].mxu0
        %v505 = vadd.f32 0.0, %v504
        %v506 = vpop.f32.mrb[0].mxu0
        %507 = vmatprep.mubr.f32.mxu0 0.0
        %508 = vmatmul.mubr.f32.gmra.mrb[0].mxu0 %v315
        %v509 = vpop.f32.mrb[0].mxu0
        %v510 = vadd.f32 0.0, %v509
        %v511 = vpop.f32.mrb[0].mxu0
        %512 = vmatprep.mubr.f32.mxu0 0.0
        %513 = vmatmul.mubr.f32.gmra.mrb[0].mxu0 %v316
        %v514 = vpop.f32.mrb[0].mxu0
        %v515 = vadd.f32 0.0, %v514
        %v516 = vpop.f32.mrb[0].mxu0
        %517 = vmatprep.mubr.f32.mxu0 0.0
        %518 = vmatmul.mubr.f32.gmra.mrb[0].mxu0 %v317
        %v519 = vpop.f32.mrb[0].mxu0
        %v520 = vadd.f32 0.0, %v519
        %v521 = vpop.f32.mrb[0].mxu0
        %522 = vmatprep.mubr.f32.mxu0 0.0
        %523 = vmatmul.mubr.f32.gmra.mrb[0].mxu0 %v318
        %v524 = vpop.f32.mrb[0].mxu0
        %v525 = vadd.f32 0.0, %v524
        %v526 = vpop.f32.mrb[0].mxu0
        %527 = vmatprep.mubr.f32.mxu0 0.0
        %528 = vmatmul.mubr.f32.gmra.mrb[0].mxu0 %v319
        %v529 = vpop.f32.mrb[0].mxu0
        %v530 = vadd.f32 0.0, %v529
        %v531 = vpop.f32.mrb[0].mxu0
        %532 = vmatprep.mubr.f32.mxu0 0.0
        %533 = vmatmul.mubr.f32.gmra.mrb[0].mxu0 %v320
        %v534 = vpop.f32.mrb[0].mxu0
        %v535 = vadd.f32 0.0, %v534
        %v536 = vpop.f32.mrb[0].mxu0
        %537 = vmatprep.mubr.f32.mxu0 0.0
        %538 = vmatmul.mubr.f32.gmra.mrb[0].mxu0 %v321
        %v539 = vpop.f32.mrb[0].mxu0
        %v540 = vadd.f32 0.0, %v539
        %v541 = vpop.f32.mrb[0].mxu0
        %542 = vmatprep.mubr.f32.mxu0 0.0
        %543 = vmatmul.mubr.f32.gmra.mrb[0].mxu0 %v322
        %v544 = vpop.f32.mrb[0].mxu0
        %v545 = vadd.f32 0.0, %v544
        %v546 = vpop.f32.mrb[0].mxu0
        %547 = vmatprep.mubr.f32.mxu0 0.0
        %548 = vmatmul.mubr.f32.gmra.mrb[0].mxu0 %v323
        %v549 = vpop.f32.mrb[0].mxu0
        %v550 = vadd.f32 0.0, %v549
        %v551 = vpop.f32.mrb[0].mxu0
        %552 = vmatprep.mubr.f32.mxu0 0.0
        %553 = vmatmul.mubr.f32.gmra.mrb[0].mxu0 %v324
        %v554 = vpop.f32.mrb[0].mxu0
        %v555 = vadd.f32 0.0, %v554
        %v556 = vpop.f32.mrb[0].mxu0
        %557 = vmatprep.mubr.f32.mxu0 0.0
        %558 = vmatmul.mubr.f32.gmra.mrb[0].mxu0 %v325
        %v559 = vpop.f32.mrb[0].mxu0
        %v560 = vadd.f32 0.0, %v559
        %v561 = vpop.f32.mrb[0].mxu0
        %562 = vmatprep.mubr.f32.mxu0 0.0
        %563 = vmatmul.mubr.f32.gmra.mrb[0].mxu0 %v326
        %v564 = vpop.f32.mrb[0].mxu0
        %v565 = vadd.f32 0.0, %v564
        %v566 = vpop.f32.mrb[0].mxu0
        %567 = vdwg.mxu0
        %v568 = vld [vmem:[%s290] sm:$0x1]
        %v570 = vlaneseq
        %v571 = vshrl.u32 %v570, 7
        %v572 = vsub.s32 0, %v571
        %v573 = vrot.slane %v568, %v572
        %v575 = vmul.f32 %v410, %v573
        %v576 = vmul.f32 %v415, %v573
        %v577 = vmul.f32 %v420, %v573
        %v578 = vmul.f32 %v425, %v573
        %v579 = vmul.f32 %v430, %v573
        %v580 = vmul.f32 %v435, %v573
        %v581 = vmul.f32 %v440, %v573
        %v582 = vmul.f32 %v445, %v573
        %v583 = vmul.f32 %v450, %v573
        %v584 = vmul.f32 %v455, %v573
        %v585 = vmul.f32 %v460, %v573
        %v586 = vmul.f32 %v465, %v573
        %v587 = vmul.f32 %v470, %v573
        %v588 = vmul.f32 %v475, %v573
        %v589 = vmul.f32 %v480, %v573
        %v590 = vmul.f32 %v485, %v573
        %v591 = vmul.f32 %v490, %v573
        %v592 = vmul.f32 %v495, %v573
        %v593 = vmul.f32 %v500, %v573
        %v594 = vmul.f32 %v505, %v573
        %v595 = vmul.f32 %v510, %v573
        %v596 = vmul.f32 %v515, %v573
        %v597 = vmul.f32 %v520, %v573
        %v598 = vmul.f32 %v525, %v573
        %v599 = vmul.f32 %v530, %v573
        %v600 = vmul.f32 %v535, %v573
        %v601 = vmul.f32 %v540, %v573
        %v602 = vmul.f32 %v545, %v573
        %v603 = vmul.f32 %v550, %v573
        %v604 = vmul.f32 %v555, %v573
        %v605 = vmul.f32 %v560, %v573
        %v606 = vmul.f32 %v565, %v573
        %v607 = vld [vmem:[%s293] sm:$0x1]
        %v609 = vlaneseq
        %v610 = vshrl.u32 %v609, 7
        %v611 = vsub.s32 0, %v610
        %v612 = vrot.slane %v607, %v611
        %v614 = vadd.f32 %v575, %v612
        %v615 = vadd.f32 %v576, %v612
        %v616 = vadd.f32 %v577, %v612
        %v617 = vadd.f32 %v578, %v612
        %v618 = vadd.f32 %v579, %v612
        %v619 = vadd.f32 %v580, %v612
        %v620 = vadd.f32 %v581, %v612
        %v621 = vadd.f32 %v582, %v612
        %v622 = vadd.f32 %v583, %v612
        %v623 = vadd.f32 %v584, %v612
        %v624 = vadd.f32 %v585, %v612
        %v625 = vadd.f32 %v586, %v612
        %v626 = vadd.f32 %v587, %v612
        %v627 = vadd.f32 %v588, %v612
        %v628 = vadd.f32 %v589, %v612
        %v629 = vadd.f32 %v590, %v612
        %v630 = vadd.f32 %v591, %v612
        %v631 = vadd.f32 %v592, %v612
        %v632 = vadd.f32 %v593, %v612
        %v633 = vadd.f32 %v594, %v612
        %v634 = vadd.f32 %v595, %v612
        %v635 = vadd.f32 %v596, %v612
        %v636 = vadd.f32 %v597, %v612
        %v637 = vadd.f32 %v598, %v612
        %v638 = vadd.f32 %v599, %v612
        %v639 = vadd.f32 %v600, %v612
        %v640 = vadd.f32 %v601, %v612
        %v641 = vadd.f32 %v602, %v612
        %v642 = vadd.f32 %v603, %v612
        %v643 = vadd.f32 %v604, %v612
        %v644 = vadd.f32 %v605, %v612
        %v645 = vadd.f32 %v606, %v612
        %646 = vst [vmem:[%s286] sm:$0xff] %v614
        %647 = vst [vmem:[%s286 + $0x8] sm:$0xff] %v615
        %648 = vst [vmem:[%s286 + $0x10] sm:$0xff] %v616
        %649 = vst [vmem:[%s286 + $0x18] sm:$0xff] %v617
        %650 = vst [vmem:[%s286 + $0x20] sm:$0xff] %v618
        %651 = vst [vmem:[%s286 + $0x28] sm:$0xff] %v619
        %652 = vst [vmem:[%s286 + $0x30] sm:$0xff] %v620
        %653 = vst [vmem:[%s286 + $0x38] sm:$0xff] %v621
        %654 = vst [vmem:[%s286 + $0x40] sm:$0xff] %v622
        %655 = vst [vmem:[%s286 + $0x48] sm:$0xff] %v623
        %656 = vst [vmem:[%s286 + $0x50] sm:$0xff] %v624
        %657 = vst [vmem:[%s286 + $0x58] sm:$0xff] %v625
        %658 = vst [vmem:[%s286 + $0x60] sm:$0xff] %v626
        %659 = vst [vmem:[%s286 + $0x68] sm:$0xff] %v627
        %660 = vst [vmem:[%s286 + $0x70] sm:$0xff] %v628
        %661 = vst [vmem:[%s286 + $0x78] sm:$0xff] %v629
        %662 = vst [vmem:[%s286 + $0x80] sm:$0xff] %v630
        %663 = vst [vmem:[%s286 + $0x88] sm:$0xff] %v631
        %664 = vst [vmem:[%s286 + $0x90] sm:$0xff] %v632
        %665 = vst [vmem:[%s286 + $0x98] sm:$0xff] %v633
        %666 = vst [vmem:[%s286 + $0xa0] sm:$0xff] %v634
        %667 = vst [vmem:[%s286 + $0xa8] sm:$0xff] %v635
        %668 = vst [vmem:[%s286 + $0xb0] sm:$0xff] %v636
        %669 = vst [vmem:[%s286 + $0xb8] sm:$0xff] %v637
        %670 = vst [vmem:[%s286 + $0xc0] sm:$0xff] %v638
        %671 = vst [vmem:[%s286 + $0xc8] sm:$0xff] %v639
        %672 = vst [vmem:[%s286 + $0xd0] sm:$0xff] %v640
        %673 = vst [vmem:[%s286 + $0xd8] sm:$0xff] %v641
        %674 = vst [vmem:[%s286 + $0xe0] sm:$0xff] %v642
        %675 = vst [vmem:[%s286 + $0xe8] sm:$0xff] %v643
        %676 = vst [vmem:[%s286 + $0xf0] sm:$0xff] %v644
        %677 = vst [vmem:[%s286 + $0xf8] sm:$0xff] %v645
        %s678 = sand.u32 %s159, 1
        %s679 = scalar_lea.sflag [#allocation4], %s678
        %s680 = sand.u32 %s159, 1
        %s681 = smul.addr %s680, 256
        %s682 = scalar_lea.vmem [#allocation7], %s681
        // Predicated region
        $region45: #{tpu_custom_call.1} parent=35 // pred_check
          %p683 = pneg %p169
        $region46: #{tpu_custom_call.1} parent=35 // pred_check_branch
          %685 = sbr.rel (%p683) target = $region48
        $region47: #{tpu_custom_call.1} parent=35 // pred_region
          %s686 = smul.u32 32, %s28
          %s688 = ssub.s32 4096, 4096
          %689 = vsyncadd %s679, %s688
          %s690 = sadd.s32 %s29, %s686
          %s691 = smul.addr %s27, 32
          %s692 = sadd.s32 %s690, %s691
          %s693 = smul.addr %s692, 128
          %s694 = scalar_lea.hbm %s4, %s693
          %s695 = sshll.u32 %s682, 4
          %s696 = int_to_ptr.vmem [resolvable:$true] %s695
          %701 = dma.vmem_to_hbm [thread:$0]  %s696, 4096, %s694, %s679, 128, 128, 8
        $region48: #{tpu_custom_call.1} parent=35 // pred_fallthru
          _
      $region36: #{tpu_custom_call.1} parent=5 // pred_fallthru
        _
      %p702 = scmp.le.s32.totalorder 2, %s17
      // Predicated region
      $region49: #{tpu_custom_call.1} parent=5 // pred_check
        %p703 = pneg %p702
      $region50: #{tpu_custom_call.1} parent=5 // pred_check_branch
        %705 = sbr.rel (%p703) target = $region52
      $region51: #{tpu_custom_call.1} parent=5 // pred_region
        %s706 = ssub.s32 %s17, 2
        // Predicated region
        $region53: #{tpu_custom_call.1} parent=51 // pred_check
          %p707 = pneg %p175
        $region54: #{tpu_custom_call.1} parent=51 // pred_check_branch
          %709 = sbr.rel (%p707) target = $region56
        $region55: #{tpu_custom_call.1} parent=51 // pred_region
          %s710 = sand.u32 %s160, 1
          %s711 = scalar_lea.sflag [#allocation4], %s710
          %s712 = sand.u32 %s160, 1
          %s713 = smul.addr %s712, 256
          %s714 = scalar_lea.vmem [#allocation7], %s713
          %715 = dma.done %s711, 4096
        $region56: #{tpu_custom_call.1} parent=51 // pred_fallthru
          _
      $region52: #{tpu_custom_call.1} parent=5 // pred_fallthru
        _
    $region6: #{tpu_custom_call.1} parent=1 // loop_footer
      %s21 = sadd.s32 1, %s17
    $region7: #{tpu_custom_call.1} parent=1 // loop_footer_branch
      %16 = sbr.rel target = $region3
    $region8: #{tpu_custom_call.1} parent=1 // loop_exit
      _
    %716 = vsyncpa [#allocation3], 1
    %s717 = scalar_lea.sflag [#allocation3], 1
    %718 = vsyncpa %s717, 1
    %719 = vsyncpa [#allocation6], 1
    %720 = vsyncpa [#allocation4], 1
    %s721 = scalar_lea.sflag [#allocation4], 1
    %722 = vsyncpa %s721, 1

</llo_original>
